<compile_context>
chip_gen: v5e
topology: v5e:2x2
jax: 0.10.0
libtpu: 0.0.40
codegen_flags: <defaults>
</compile_context>

<pallas_src>
import functools

import jax
import jax.numpy as jnp
from jax import lax
from jax.experimental import pallas as pl
from jax.experimental.pallas import tpu as pltpu


def _round_up(x, m):
    return ((x + m - 1) // m) * m


def _ce_label_smooth_kernel(logits_ref, labels_ref, partial_ref,
                            m_sc, l_sc, w_sc, *,
                            epsilon, num_classes, num_rows,
                            tile_rows, class_block,
                            mask_rows, mask_classes):
    i = pl.program_id(0)          # row-tile index       ("parallel")
    k = pl.program_id(1)          # class-block index    ("arbitrary")

    @pl.when(k == 0)
    def _():
        m_sc[...] = jnp.full_like(m_sc, -jnp.inf)
        l_sc[...] = jnp.zeros_like(l_sc)
        w_sc[...] = jnp.zeros_like(w_sc)

    x = logits_ref[...].astype(jnp.float32)                 # [TN, CB] f32
    labels = labels_ref[...]                                 # [TN, 1] int32

    # Class ids of this block as a (1, CB) row; broadcast against labels.
    class_ids = k * class_block + lax.broadcasted_iota(
        jnp.int32, (1, class_block), 1)                      # (1, CB)

    # Fused smoothed-target weight (single [TN, CB] reduction):
    #   w[c] = eps/C + (1 - eps) * [c == y]
    match = (class_ids == labels).astype(jnp.float32)        # [TN, CB]
    if mask_classes:
        valid = class_ids < num_classes                      # (1, CB)
        w = (jnp.where(valid, epsilon / num_classes, 0.0)
             + (1.0 - epsilon) * match)
        w_sc[...] += jnp.sum(jnp.where(valid, w * x, 0.0),
                             axis=1, keepdims=True)
        x_m = jnp.where(valid, x, -jnp.inf)
    else:
        w = epsilon / num_classes + (1.0 - epsilon) * match
        w_sc[...] += jnp.sum(w * x, axis=1, keepdims=True)
        x_m = x

    # Online (flash-style) logsumexp over class blocks.
    m_new = jnp.maximum(m_sc[...], jnp.max(x_m, axis=1, keepdims=True))
    l_sc[...] = (l_sc[...] * jnp.exp(m_sc[...] - m_new)
                 + jnp.sum(jnp.exp(x_m - m_new), axis=1, keepdims=True))
    m_sc[...] = m_new

    @pl.when(k == pl.num_programs(1) - 1)
    def _():
        lse = m_sc[...] + jnp.log(l_sc[...])                 # [TN, 1]
        # sum_c t[c] == 1  =>  per-row loss = lse - sum_c w[c] * x[c]
        row_loss = lse - w_sc[...]                           # [TN, 1]
        if mask_rows:
            # Zero rows past the real batch (ragged last tile reads padding).
            row_ids = i * tile_rows + lax.broadcasted_iota(
                jnp.int32, (tile_rows, 1), 0)
            row_loss = jnp.where(row_ids < num_rows, row_loss, 0.0)
        partial = jnp.sum(row_loss)
        # One unmasked (8,128) store: broadcast the scalar over the block; the
        # wrapper reads element [0, 0] of each tile block.
        partial_ref[...] = jnp.full(partial_ref.shape, partial, jnp.float32)


def _vmem_limit_bytes():
    # 64 MiB equals v7x's ENTIRE physical VMEM -> leave headroom there; keep
    # 64 MiB on v5e/v6e (128 MiB physical).
    try:
        cap = pltpu.get_tpu_info().vmem_capacity_bytes
    except Exception:
        cap = 128 * 1024 * 1024
    return int(min(64 * 1024 * 1024, int(cap * 0.7)))


def _choose_tiles(N, C, itemsize, target_tile_bytes, max_class_block):
    # Native packed sublane multiple: f32 -> 8, bf16 -> 16, int8/fp8 -> 32.
    sub = {4: 8, 2: 16, 1: 32}.get(itemsize, 8)
    # Class-axis block: stream vocab-scale C in bounded chunks.
    if C <= max_class_block:
        CB = C
    else:
        CB = max(128, (max_class_block // 128) * 128)
    # Byte-based row tile: ~target_tile_bytes of native-dtype logits per step.
    TN = max(sub, ((target_tile_bytes // max(1, CB * itemsize)) // sub) * sub)
    TN = min(TN, _round_up(N, sub), 4096)
    TN = max(sub, (TN // sub) * sub)
    # v7x has two TensorCores: ensure >= 2 row tiles when the batch allows.
    if N > sub and pl.cdiv(N, TN) < 2:
        TN = max(sub, _round_up(pl.cdiv(N, 2), sub))
    return TN, CB


def cross_entropy_label_smooth(logits, targets, epsilon, *,
                               target_tile_bytes=4 * 1024 * 1024,
                               max_class_block=4096):
    """logits: [N, C] float (f32 or bf16), targets: [N] int class ids.

    Returns the scalar label-smoothed cross-entropy loss (float32).
    """
    N, C = logits.shape
    itemsize = jnp.dtype(logits.dtype).itemsize
    TN, CB = _choose_tiles(N, C, itemsize, target_tile_bytes, max_class_block)
    num_row_tiles = pl.cdiv(N, TN)
    num_class_tiles = pl.cdiv(C, CB)

    labels2d = targets.reshape(N, 1).astype(jnp.int32)

    kernel = functools.partial(
        _ce_label_smooth_kernel,
        epsilon=float(epsilon),
        num_classes=int(C),
        num_rows=int(N),
        tile_rows=int(TN),
        class_block=int(CB),
        mask_rows=(N % TN != 0),
        mask_classes=(C % CB != 0),
    )

    partials = pl.pallas_call(
        kernel,
        out_shape=jax.ShapeDtypeStruct((num_row_tiles * 8, 128), jnp.float32),
        grid_spec=pltpu.PrefetchScalarGridSpec(
            num_scalar_prefetch=0,
            grid=(num_row_tiles, num_class_tiles),
            in_specs=[
                pl.BlockSpec((TN, CB), lambda i, k: (i, k)),   # logits tile
                pl.BlockSpec((TN, 1), lambda i, k: (i, 0)),    # labels tile
            ],
            out_specs=pl.BlockSpec((8, 128), lambda i, k: (i, 0)),
            scratch_shapes=[pltpu.VMEM((TN, 1), jnp.float32),   # running max
                            pltpu.VMEM((TN, 1), jnp.float32),   # running sumexp
                            pltpu.VMEM((TN, 1), jnp.float32)],  # weighted sum
        ),
        compiler_params=pltpu.CompilerParams(
            dimension_semantics=("parallel", "arbitrary"),
            vmem_limit_bytes=_vmem_limit_bytes(),
        ),
    )(logits, labels2d)

    # Each row tile broadcast its scalar partial over its (8,128) block; pick
    # one element per tile, sum, then the batch mean.
    per_tile = partials[::8, 0]
    return jnp.sum(per_tile) / N


def _reference(logits, targets, epsilon):
    # Pure-JAX reference matching the PyTorch module exactly.
    N, C = logits.shape
    log_probs = jax.nn.log_softmax(logits.astype(jnp.float32), axis=1)
    one_hot = jax.nn.one_hot(targets, C, dtype=jnp.float32)
    t = (1.0 - epsilon) * one_hot + epsilon / C
    return jnp.sum(jnp.mean(-t * log_probs, axis=0))


if __name__ == "__main__":
    key = jax.random.PRNGKey(0)

    # Case 1: small f32 logits; batch not a multiple of the row tile (masking).
    k1, k2 = jax.random.split(key)
    N, C, eps = 20, 16, 0.1
    logits = jax.random.normal(k1, (N, C), dtype=jnp.float32)
    targets = jax.random.randint(k2, (N,), 0, C, dtype=jnp.int32)
    loss = cross_entropy_label_smooth(logits, targets, eps)
    jax.block_until_ready(loss)
    ref = _reference(logits, targets, eps)
    assert jnp.allclose(loss, ref, rtol=1e-5, atol=1e-5), (loss, ref)

    # Case 2: force the class-axis online-LSE path (C streamed in 128-wide
    # blocks, ragged last class block + ragged last row tile).
    k3, k4 = jax.random.split(k2)
    N2, C2, eps2 = 12, 300, 0.2
    logits2 = jax.random.normal(k3, (N2, C2), dtype=jnp.float32)
    targets2 = jax.random.randint(k4, (N2,), 0, C2, dtype=jnp.int32)
    loss2 = cross_entropy_label_smooth(logits2, targets2, eps2,
                                       max_class_block=128)
    jax.block_until_ready(loss2)
    ref2 = _reference(logits2, targets2, eps2)
    assert jnp.allclose(loss2, ref2, rtol=1e-5, atol=1e-5), (loss2, ref2)

    # Case 3: bf16 logits (native-dtype DMA, 16-row sublane multiple).
    k5, k6 = jax.random.split(k4)
    N3, C3, eps3 = 24, 40, 0.1
    logits3 = jax.random.normal(k5, (N3, C3), dtype=jnp.bfloat16)
    targets3 = jax.random.randint(k6, (N3,), 0, C3, dtype=jnp.int32)
    loss3 = cross_entropy_label_smooth(logits3, targets3, eps3)
    jax.block_until_ready(loss3)
    ref3 = _reference(logits3, targets3, eps3)
    assert jnp.allclose(loss3, ref3, rtol=1e-4, atol=1e-4), (loss3, ref3)

    print("KERNEL_OK")
</pallas_src>

<mosaic_0001>
module attributes {stable_mosaic.version = 11 : i64} {
  func.func @_ce_label_smooth_kernel(%arg0: i32, %arg1: i32, %arg2: memref<16x16xf32, #tpu.memory_space<vmem>>, %arg3: memref<16x1xi32, #tpu.memory_space<vmem>>, %arg4: memref<8x128xf32, #tpu.memory_space<vmem>>, %arg5: memref<16x1xf32, #tpu.memory_space<vmem>>, %arg6: memref<16x1xf32, #tpu.memory_space<vmem>>, %arg7: memref<16x1xf32, #tpu.memory_space<vmem>>) attributes {dimension_semantics = [#tpu.dimension_semantics<parallel>, #tpu.dimension_semantics<arbitrary>], iteration_bounds = array<i64: 2, 1>, scalar_prefetch = 0 : i64, scratch_operands = 3 : i64, tpu.core_type = #tpu.core_type<tc>, window_params = [{transform_indices = @transform_0, window_bounds = array<i64: 16, 16>}, {transform_indices = @transform_1, window_bounds = array<i64: 16, 1>}, {transform_indices = @transform_2, window_bounds = array<i64: 8, 128>}]} {
    %c0_i32 = arith.constant 0 : i32
    %0 = arith.cmpi eq, %arg1, %c0_i32 : i32
    %1 = arith.extui %0 : i1 to i32
    %c0_i32_0 = arith.constant 0 : i32
    %2 = arith.cmpi ne, %1, %c0_i32_0 : i32
    scf.if %2 {
      %cst_24 = arith.constant 0xFF800000 : f32
      %44 = vector.broadcast %cst_24 : f32 to vector<16x1xf32>
      %c0_25 = arith.constant 0 : index
      %c0_26 = arith.constant 0 : index
      %45 = vector.load %arg5[%c0_25, %c0_26] : memref<16x1xf32, #tpu.memory_space<vmem>>, vector<16x1xf32>
      tpu.vector_store %arg5[%c0_25, %c0_26], %44 {strides = array<i32>} : memref<16x1xf32, #tpu.memory_space<vmem>>, vector<16x1xf32>,
      %cst_27 = arith.constant 0.000000e+00 : f32
      %46 = vector.broadcast %cst_27 : f32 to vector<16x1xf32>
      %c0_28 = arith.constant 0 : index
      %c0_29 = arith.constant 0 : index
      %47 = vector.load %arg6[%c0_28, %c0_29] : memref<16x1xf32, #tpu.memory_space<vmem>>, vector<16x1xf32>
      tpu.vector_store %arg6[%c0_28, %c0_29], %46 {strides = array<i32>} : memref<16x1xf32, #tpu.memory_space<vmem>>, vector<16x1xf32>,
      %cst_30 = arith.constant 0.000000e+00 : f32
      %48 = vector.broadcast %cst_30 : f32 to vector<16x1xf32>
      %c0_31 = arith.constant 0 : index
      %c0_32 = arith.constant 0 : index
      %49 = vector.load %arg7[%c0_31, %c0_32] : memref<16x1xf32, #tpu.memory_space<vmem>>, vector<16x1xf32>
      tpu.vector_store %arg7[%c0_31, %c0_32], %48 {strides = array<i32>} : memref<16x1xf32, #tpu.memory_space<vmem>>, vector<16x1xf32>,
    } else {
    }
    %c0 = arith.constant 0 : index
    %c0_1 = arith.constant 0 : index
    %3 = vector.load %arg2[%c0, %c0_1] : memref<16x16xf32, #tpu.memory_space<vmem>>, vector<16x16xf32>
    %c0_2 = arith.constant 0 : index
    %c0_3 = arith.constant 0 : index
    %4 = vector.load %arg3[%c0_2, %c0_3] : memref<16x1xi32, #tpu.memory_space<vmem>>, vector<16x1xi32>
    %c16_i32 = arith.constant 16 : i32
    %5 = arith.muli %arg1, %c16_i32 : i32
    %6 = tpu.iota {dimensions = array<i32: 1>} : vector<1x16xi32>
    %7 = vector.broadcast %5 : i32 to vector<1x16xi32>
    %8 = arith.addi %7, %6 : vector<1x16xi32>
    %9 = vector.broadcast %8 : vector<1x16xi32> to vector<16x16xi32>
    %10 = vector.broadcast %4 : vector<16x1xi32> to vector<16x16xi32>
    %11 = arith.cmpi eq, %9, %10 : vector<16x16xi32>
    %12 = arith.extui %11 : vector<16x16xi1> to vector<16x16xi32>
    %13 = arith.sitofp %12 : vector<16x16xi32> to vector<16x16xf32>
    %cst = arith.constant 0.899999976 : f32
    %14 = vector.broadcast %cst : f32 to vector<16x16xf32>
    %15 = arith.mulf %14, %13 : vector<16x16xf32>
    %cst_4 = arith.constant 6.250000e-03 : f32
    %16 = vector.broadcast %cst_4 : f32 to vector<16x16xf32>
    %17 = arith.addf %16, %15 : vector<16x16xf32>
    %c0_5 = arith.constant 0 : index
    %c0_6 = arith.constant 0 : index
    %18 = vector.load %arg7[%c0_5, %c0_6] : memref<16x1xf32, #tpu.memory_space<vmem>>, vector<16x1xf32>
    %19 = arith.mulf %17, %3 : vector<16x16xf32>
    %cst_7 = arith.constant dense<0.000000e+00> : vector<16xf32>
    %20 = vector.multi_reduction <add>, %19, %cst_7 [1] : vector<16x16xf32> to vector<16xf32>
    %21 = vector.shape_cast %20 : vector<16xf32> to vector<16x1xf32>
    %22 = arith.addf %18, %21 : vector<16x1xf32>
    %c0_8 = arith.constant 0 : index
    %c0_9 = arith.constant 0 : index
    %23 = vector.load %arg7[%c0_8, %c0_9] : memref<16x1xf32, #tpu.memory_space<vmem>>, vector<16x1xf32>
    tpu.vector_store %arg7[%c0_8, %c0_9], %22 {strides = array<i32>} : memref<16x1xf32, #tpu.memory_space<vmem>>, vector<16x1xf32>,
    %c0_10 = arith.constant 0 : index
    %c0_11 = arith.constant 0 : index
    %24 = vector.load %arg5[%c0_10, %c0_11] : memref<16x1xf32, #tpu.memory_space<vmem>>, vector<16x1xf32>
    %cst_12 = arith.constant dense<0xFF800000> : vector<16xf32>
    %25 = vector.multi_reduction <maximumf>, %3, %cst_12 [1] : vector<16x16xf32> to vector<16xf32>
    %26 = vector.shape_cast %25 : vector<16xf32> to vector<16x1xf32>
    %27 = arith.maximumf %24, %26 : vector<16x1xf32>
    %c0_13 = arith.constant 0 : index
    %c0_14 = arith.constant 0 : index
    %28 = vector.load %arg6[%c0_13, %c0_14] : memref<16x1xf32, #tpu.memory_space<vmem>>, vector<16x1xf32>
    %c0_15 = arith.constant 0 : index
    %c0_16 = arith.constant 0 : index
    %29 = vector.load %arg5[%c0_15, %c0_16] : memref<16x1xf32, #tpu.memory_space<vmem>>, vector<16x1xf32>
    %30 = arith.subf %29, %27 : vector<16x1xf32>
    %31 = math.exp %30 : vector<16x1xf32>
    %32 = arith.mulf %28, %31 : vector<16x1xf32>
    %33 = vector.broadcast %27 : vector<16x1xf32> to vector<16x16xf32>
    %34 = arith.subf %3, %33 : vector<16x16xf32>
    %35 = math.exp %34 : vector<16x16xf32>
    %cst_17 = arith.constant dense<0.000000e+00> : vector<16xf32>
    %36 = vector.multi_reduction <add>, %35, %cst_17 [1] : vector<16x16xf32> to vector<16xf32>
    %37 = vector.shape_cast %36 : vector<16xf32> to vector<16x1xf32>
    %38 = arith.addf %32, %37 : vector<16x1xf32>
    %c0_18 = arith.constant 0 : index
    %c0_19 = arith.constant 0 : index
    %39 = vector.load %arg6[%c0_18, %c0_19] : memref<16x1xf32, #tpu.memory_space<vmem>>, vector<16x1xf32>
    tpu.vector_store %arg6[%c0_18, %c0_19], %38 {strides = array<i32>} : memref<16x1xf32, #tpu.memory_space<vmem>>, vector<16x1xf32>,
    %c0_20 = arith.constant 0 : index
    %c0_21 = arith.constant 0 : index
    %40 = vector.load %arg5[%c0_20, %c0_21] : memref<16x1xf32, #tpu.memory_space<vmem>>, vector<16x1xf32>
    tpu.vector_store %arg5[%c0_20, %c0_21], %27 {strides = array<i32>} : memref<16x1xf32, #tpu.memory_space<vmem>>, vector<16x1xf32>,
    %c0_i32_22 = arith.constant 0 : i32
    %41 = arith.cmpi eq, %arg1, %c0_i32_22 : i32
    %42 = arith.extui %41 : i1 to i32
    %c0_i32_23 = arith.constant 0 : i32
    %43 = arith.cmpi ne, %42, %c0_i32_23 : i32
    scf.if %43 {
      %c0_24 = arith.constant 0 : index
      %c0_25 = arith.constant 0 : index
      %44 = vector.load %arg5[%c0_24, %c0_25] : memref<16x1xf32, #tpu.memory_space<vmem>>, vector<16x1xf32>
      %c0_26 = arith.constant 0 : index
      %c0_27 = arith.constant 0 : index
      %45 = vector.load %arg6[%c0_26, %c0_27] : memref<16x1xf32, #tpu.memory_space<vmem>>, vector<16x1xf32>
      %46 = math.log %45 : vector<16x1xf32>
      %47 = arith.addf %44, %46 : vector<16x1xf32>
      %c0_28 = arith.constant 0 : index
      %c0_29 = arith.constant 0 : index
      %48 = vector.load %arg7[%c0_28, %c0_29] : memref<16x1xf32, #tpu.memory_space<vmem>>, vector<16x1xf32>
      %49 = arith.subf %47, %48 : vector<16x1xf32>
      %c16_i32_30 = arith.constant 16 : i32
      %50 = arith.muli %arg0, %c16_i32_30 : i32
      %51 = tpu.iota {dimensions = array<i32: 0>} : vector<16x1xi32>
      %52 = vector.broadcast %50 : i32 to vector<16x1xi32>
      %53 = arith.addi %52, %51 : vector<16x1xi32>
      %c20_i32 = arith.constant 20 : i32
      %54 = vector.broadcast %c20_i32 : i32 to vector<16x1xi32>
      %55 = arith.cmpi slt, %53, %54 : vector<16x1xi32>
      %cst_31 = arith.constant 0.000000e+00 : f32
      %56 = vector.broadcast %cst_31 : f32 to vector<16x1xf32>
      %57 = arith.select %55, %49, %56 : vector<16x1xi1>, vector<16x1xf32>
      %58 = vector.shape_cast %57 : vector<16x1xf32> to vector<1x16x1xf32>
      %cst_32 = arith.constant dense<0.000000e+00> : vector<1xf32>
      %59 = vector.multi_reduction <add>, %58, %cst_32 [1, 2] : vector<1x16x1xf32> to vector<1xf32>
      %60 = vector.shape_cast %59 : vector<1xf32> to vector<1x1x1xf32>
      %61 = vector.extract %60[0, 0, 0] : f32 from vector<1x1x1xf32>
      %62 = vector.broadcast %61 : f32 to vector<8x128xf32>
      %c0_33 = arith.constant 0 : index
      %c0_34 = arith.constant 0 : index
      %63 = vector.load %arg4[%c0_33, %c0_34] : memref<8x128xf32, #tpu.memory_space<vmem>>, vector<8x128xf32>
      tpu.vector_store %arg4[%c0_33, %c0_34], %62 {strides = array<i32>} : memref<8x128xf32, #tpu.memory_space<vmem>>, vector<8x128xf32>,
    } else {
    }
    return
  }
  func.func @transform_0(%arg0: i32, %arg1: i32) -> (i32, i32) {
    %c0_i32 = arith.constant 0 : i32
    return %arg0, %arg1 : i32, i32
  }
  func.func @transform_1(%arg0: i32, %arg1: i32) -> (i32, i32) {
    %c0_i32 = arith.constant 0 : i32
    %c0_i32_0 = arith.constant 0 : i32
    return %arg0, %c0_i32 : i32, i32
  }
  func.func @transform_2(%arg0: i32, %arg1: i32) -> (i32, i32) {
    %c0_i32 = arith.constant 0 : i32
    %c0_i32_0 = arith.constant 0 : i32
    return %arg0, %c0_i32 : i32, i32
  }
}

</mosaic_0001>

<llo_original>
// kernel: tpu_custom_call.1
$region0: #{tpu_custom_call.1}
  #allocation0 [shape = 'u32[]', space=smem, size = 0x4, offset = 0x4, fixed_abs, tag = 'smem constant byte address 0x4 - core index']
  #allocation1 [shape = 'u32[72,128]{1,0:T(1,128)}', space=vmem, size = 0x9000, scoped, tag = 'internal scratch']
  #allocation2 [shape = 'f32[16,1]{1,0:T(8,128)}', space=vmem, size = 0x2000, scoped, tag = 'scratch operand']
  #allocation3 [shape = 'f32[16,1]{1,0:T(8,128)}', space=vmem, size = 0x2000, scoped, tag = 'scratch operand']
  #allocation4 [shape = 'f32[16,1]{1,0:T(8,128)}', space=vmem, size = 0x2000, scoped, tag = 'scratch operand']
  %s0 = inlined_call_operand.vmem [shape: f32[20,16], index: 0, kind: input, shape index: {}]
  %s1 = inlined_call_operand.vmem [shape: s32[20,1], index: 1, kind: input, shape index: {}]
  %s2 = inlined_call_operand.hbm [shape: f32[16,128], index: 2, kind: output, shape index: {}]
  %s3 = sld [smem:[#allocation0]]
  $region49: #{tpu_custom_call.1} parent=0
    _
  %s5 = ssub.s32 1, %s3
  %s6 = scalar_select 0, %s5, %s3
  $region1: #{tpu_custom_call.1} parent=0
    #allocation5 [shape = 'u8[8192]{0}', space=vmem, size = 0x2000, scoped, tag = 'output window, operand 0']
    #allocation6 [shape = 's32[2]{0}', space=sflag, size = 0x8, scoped, tag = 'scoped memory for tpu_custom_call.1']
    %7 = vsyncpa [#allocation6], 0
    %s8 = scalar_lea.sflag [#allocation6], 1
    %9 = vsyncpa %s8, 0
    loop: start=0, step=1, limit=4
    $region2: #{tpu_custom_call.1} parent=1 // loop_pre_header
      _
    $region3: #{tpu_custom_call.1} parent=1 // loop_header
      %s11 = sphi 0, %s15
      %p12 = scmp.ge.s32.totalorder %s11, 4
      %s18 = sphi 0, %s30
      %s19 = sphi 0, %s26
      %s20 = sphi 0, %s18
      %s21 = sphi 0, %s19
      %s22 = sphi 0, %s20
      %s23 = sphi 0, %s21
      %s35 = sphi 0, %s37
      %s38 = sphi 0, %s35
      %s39 = sphi 0, %s38
      %s55 = sphi 0, %s39
      %s61 = sphi 0, %s63
      %s64 = sphi 0, %s61
      %s65 = sphi 0, %s64
      %s81 = sphi 0, %s65
      %s87 = sphi 0, %s89
      %s90 = sphi 0, %s87
      %s91 = sphi 0, %s90
      %s107 = sphi 0, %s91
    $region4: #{tpu_custom_call.1} parent=1 // loop_header_branch
      %14 = sbr.rel (%p12) target = $region8
    $region5: #{tpu_custom_call.1} parent=1 // loop_body
      %s16 = ssub.s32 %s11, 1
      %s17 = ssub.s32 %s11, 2
      %s24 = sadd.s32 1, %s19
      %p25 = scmp.ge.s32.totalorder %s24, 1
      %s26 = scalar_select %p25, 0, %s24
      %s27 = sadd.s32 1, %s18
      %s28 = scalar_select %p25, %s27, %s18
      %p29 = scmp.ge.s32.totalorder %s28, 2
      %s30 = scalar_select %p29, 0, %s28
      %s31 = ssub.s32 %s18, %s30
      %s32 = ssub.s32 %s19, %s26
      %s33 = sor.u32 %s31, %s32
      %p34 = scmp.eq.s32.totalorder %s33, 0
      %s36 = sadd.s32 %s35, 1
      %s37 = scalar_select %p34, %s35, %s36
      %p40 = pneg %p34
      %p41 = scmp.eq.s32.totalorder %s11, 1
      %p42 = por %p40, %p41
      %p43 = scmp.ne.s32.totalorder %s35, %s38
      %p44 = scmp.eq.s32.totalorder %s11, 0
      %p45 = por %p43, %p44
      %p46 = scmp.ne.s32.totalorder %s35, %s38
      %p47 = scmp.eq.s32.totalorder %s16, 1
      %p48 = por %p46, %p47
      %p49 = scmp.ne.s32.totalorder %s38, %s39
      %p50 = scmp.eq.s32.totalorder %s16, 0
      %p51 = por %p49, %p50
      %p52 = scmp.ne.s32.totalorder %s38, %s39
      %p53 = scmp.eq.s32.totalorder %s17, 1
      %p54 = por %p52, %p53
      %p56 = scmp.ne.s32.totalorder %s39, %s55
      %p57 = scmp.eq.s32.totalorder %s17, 0
      %p58 = por %p56, %p57
      %s59 = ssub.s32 %s18, %s30
      %p60 = scmp.eq.s32.totalorder %s59, 0
      %s62 = sadd.s32 %s61, 1
      %s63 = scalar_select %p60, %s61, %s62
      %p66 = pneg %p60
      %p67 = scmp.eq.s32.totalorder %s11, 1
      %p68 = por %p66, %p67
      %p69 = scmp.ne.s32.totalorder %s61, %s64
      %p70 = scmp.eq.s32.totalorder %s11, 0
      %p71 = por %p69, %p70
      %p72 = scmp.ne.s32.totalorder %s61, %s64
      %p73 = scmp.eq.s32.totalorder %s16, 1
      %p74 = por %p72, %p73
      %p75 = scmp.ne.s32.totalorder %s64, %s65
      %p76 = scmp.eq.s32.totalorder %s16, 0
      %p77 = por %p75, %p76
      %p78 = scmp.ne.s32.totalorder %s64, %s65
      %p79 = scmp.eq.s32.totalorder %s17, 1
      %p80 = por %p78, %p79
      %p82 = scmp.ne.s32.totalorder %s65, %s81
      %p83 = scmp.eq.s32.totalorder %s17, 0
      %p84 = por %p82, %p83
      %s85 = ssub.s32 %s18, %s30
      %p86 = scmp.eq.s32.totalorder %s85, 0
      %s88 = sadd.s32 %s87, 1
      %s89 = scalar_select %p86, %s87, %s88
      %p92 = pneg %p86
      %p93 = scmp.eq.s32.totalorder %s11, 1
      %p94 = por %p92, %p93
      %p95 = scmp.ne.s32.totalorder %s87, %s90
      %p96 = scmp.eq.s32.totalorder %s11, 0
      %p97 = por %p95, %p96
      %p98 = scmp.ne.s32.totalorder %s87, %s90
      %p99 = scmp.eq.s32.totalorder %s16, 1
      %p100 = por %p98, %p99
      %p101 = scmp.ne.s32.totalorder %s90, %s91
      %p102 = scmp.eq.s32.totalorder %s16, 0
      %p103 = por %p101, %p102
      %p104 = scmp.ne.s32.totalorder %s90, %s91
      %p105 = scmp.eq.s32.totalorder %s17, 1
      %p106 = por %p104, %p105
      %p108 = scmp.ne.s32.totalorder %s91, %s107
      %p109 = scmp.eq.s32.totalorder %s17, 0
      %p110 = por %p108, %p109
      %p111 = scmp.le.s32.totalorder 1, %s11
      %p112 = scmp.lt.s32.totalorder %s11, 3
      %p113 = pnand %p111, %p112
      %p114 = pneg %p113
      // Predicated region
      $region9: #{tpu_custom_call.1} parent=5 // pred_check
        _
      $region10: #{tpu_custom_call.1} parent=5 // pred_check_branch
        %116 = sbr.rel (%p113) target = $region12
      $region11: #{tpu_custom_call.1} parent=5 // pred_region
        %s117 = ssub.s32 %s11, 1
      $region12: #{tpu_custom_call.1} parent=5 // pred_fallthru
        _
      %p118 = scmp.lt.s32.totalorder %s11, 2
      // Predicated region
      $region13: #{tpu_custom_call.1} parent=5 // pred_check
        %p119 = pneg %p118
      $region14: #{tpu_custom_call.1} parent=5 // pred_check_branch
        %121 = sbr.rel (%p119) target = $region16
      $region15: #{tpu_custom_call.1} parent=5 // pred_region
        // Predicated region
        $region17: #{tpu_custom_call.1} parent=15 // pred_check
          %p122 = pneg %p45
        $region18: #{tpu_custom_call.1} parent=15 // pred_check_branch
          %124 = sbr.rel (%p122) target = $region20
        $region19: #{tpu_custom_call.1} parent=15 // pred_region
          %s125 = smul.u32 2, %s18
          %s126 = ssub.s32 3, %s125
          %p127 = scmp.lt.s32.totalorder %s126, 2
          %s128 = scalar_select %p127, %s126, 2
          %s129 = smul.u32 8, %s128
          %p130 = scmp.lt.s32.totalorder %s125, 2
          %s131 = scalar_select %p130, %s125, 2
          %p132 = scmp.lt.s32.totalorder %s19, 0
          %s133 = scalar_select %p132, %s19, 0
          %s134 = sadd.s32 %s133, %s131
          %s135 = smul.addr %s134, 8
          %s136 = scalar_lea.vmem %s0, %s135
          %s137 = smul.u32 2, %s18
          %s138 = ssub.s32 3, %s137
          %p139 = scmp.lt.s32.totalorder %s138, 2
          %s140 = scalar_select %p139, %s138, 2
          %s141 = smul.u32 8, %s140
        $region20: #{tpu_custom_call.1} parent=15 // pred_fallthru
          _
        // Predicated region
        $region21: #{tpu_custom_call.1} parent=15 // pred_check
          %p142 = pneg %p71
        $region22: #{tpu_custom_call.1} parent=15 // pred_check_branch
          %144 = sbr.rel (%p142) target = $region24
        $region23: #{tpu_custom_call.1} parent=15 // pred_region
          %s145 = smul.u32 2, %s18
          %s146 = ssub.s32 3, %s145
          %p147 = scmp.lt.s32.totalorder %s146, 2
          %s148 = scalar_select %p147, %s146, 2
          %s149 = smul.u32 8, %s148
          %p150 = scmp.lt.s32.totalorder %s145, 2
          %s151 = scalar_select %p150, %s145, 2
          %s152 = smul.addr %s151, 8
          %s153 = scalar_lea.vmem %s1, %s152
          %s154 = smul.u32 2, %s18
          %s155 = ssub.s32 3, %s154
          %p156 = scmp.lt.s32.totalorder %s155, 2
          %s157 = scalar_select %p156, %s155, 2
          %s158 = smul.u32 8, %s157
        $region24: #{tpu_custom_call.1} parent=15 // pred_fallthru
          _
      $region16: #{tpu_custom_call.1} parent=5 // pred_fallthru
        _
      %p159 = scmp.le.s32.totalorder 1, %s11
      %p160 = scmp.lt.s32.totalorder %s11, 3
      %p161 = pnand %p159, %p160
      %p162 = pneg %p161
      // Predicated region
      $region25: #{tpu_custom_call.1} parent=5 // pred_check
        _
      $region26: #{tpu_custom_call.1} parent=5 // pred_check_branch
        %164 = sbr.rel (%p161) target = $region28
      $region27: #{tpu_custom_call.1} parent=5 // pred_region
        %s165 = ssub.s32 %s11, 1
        %s166 = smul.u32 2, %s20
        %s167 = ssub.s32 3, %s166
        %p168 = scmp.lt.s32.totalorder %s167, 2
        %s169 = scalar_select %p168, %s167, 2
        %s170 = smul.u32 8, %s169
        %p171 = scmp.lt.s32.totalorder %s166, 2
        %s172 = scalar_select %p171, %s166, 2
        %p173 = scmp.lt.s32.totalorder %s21, 0
        %s174 = scalar_select %p173, %s21, 0
        %s175 = sadd.s32 %s174, %s172
        %s176 = smul.addr %s175, 8
        %s177 = scalar_lea.vmem %s0, %s176
        %p178 = pneg %p51
        %p179 = pneg %p48
        %s180 = smul.u32 2, %s20
        %s181 = ssub.s32 3, %s180
        %p182 = scmp.lt.s32.totalorder %s181, 2
        %s183 = scalar_select %p182, %s181, 2
        %s184 = smul.u32 8, %s183
        %p185 = scmp.lt.s32.totalorder %s180, 2
        %s186 = scalar_select %p185, %s180, 2
        %s187 = smul.addr %s186, 8
        %s188 = scalar_lea.vmem %s1, %s187
        %p189 = pneg %p77
        %p190 = pneg %p74
        %p191 = pneg %p103
        %p192 = pneg %p100
        %s193 = sand.u32 %s90, 1
        %s194 = scalar_lea.sflag [#allocation6], %s193
        %s195 = sand.u32 %s90, 1
        %s196 = smul.addr %s195, 8
        %s197 = scalar_lea.vmem [#allocation5], %s196
        %s198 = smul.u32 2, %s20
        %s199 = ssub.s32 3, %s198
        %p200 = scmp.lt.s32.totalorder %s199, 2
        %s201 = scalar_select %p200, %s199, 2
        %s202 = smul.u32 8, %s201
        %p203 = scmp.lt.s32.totalorder %s198, 2
        %s204 = scalar_select %p203, %s198, 2
        %p205 = scmp.lt.s32.totalorder %s21, 0
        %s206 = scalar_select %p205, %s21, 0
        %s207 = sadd.s32 %s206, %s204
        %s208 = smul.addr %s207, 8
        %s209 = scalar_lea.vmem %s0, %s208
        %s210 = smul.u32 2, %s20
        %s211 = ssub.s32 3, %s210
        %p212 = scmp.lt.s32.totalorder %s211, 2
        %s213 = scalar_select %p212, %s211, 2
        %s214 = smul.u32 8, %s213
        %s215 = smul.u32 2, %s20
        %s216 = ssub.s32 3, %s215
        %p217 = scmp.lt.s32.totalorder %s216, 2
        %s218 = scalar_select %p217, %s216, 2
        %s219 = smul.u32 8, %s218
        %p220 = scmp.lt.s32.totalorder %s215, 2
        %s221 = scalar_select %p220, %s215, 2
        %s222 = smul.addr %s221, 8
        %s223 = scalar_lea.vmem %s1, %s222
        %s224 = smul.u32 2, %s20
        %s225 = ssub.s32 3, %s224
        %p226 = scmp.lt.s32.totalorder %s225, 2
        %s227 = scalar_select %p226, %s225, 2
        %s228 = smul.u32 8, %s227
        %p229 = scmp.eq.s32.totalorder %s21, 0
        // Predicated region
        $region29: #{tpu_custom_call.1} parent=27 // pred_check
          %p230 = pneg %p229
        $region30: #{tpu_custom_call.1} parent=27 // pred_check_branch
          %232 = sbr.rel (%p230) target = $region32
        $region31: #{tpu_custom_call.1} parent=27 // pred_region
          %vm233 = vcmask 7168
          %234 = vst.msk [vmem:[#allocation2] sm:$0xff] %vm233, -inf
          %235 = vst.msk [vmem:[#allocation2 + $0x8] sm:$0xff] %vm233, -inf
          %236 = vst.msk [vmem:[#allocation3] sm:$0xff] %vm233, 0.0
          %237 = vst.msk [vmem:[#allocation3 + $0x8] sm:$0xff] %vm233, 0.0
          %238 = vst.msk [vmem:[#allocation4] sm:$0xff] %vm233, 0.0
          %239 = vst.msk [vmem:[#allocation4 + $0x8] sm:$0xff] %vm233, 0.0
        $region32: #{tpu_custom_call.1} parent=27 // pred_fallthru
          _
        %v240 = vld [vmem:[%s209] sm:$0xff]
        %v241 = vld [vmem:[%s209 + $0x8] sm:$0xff]
        %v242 = vld [vmem:[%s223] sm:$0xff]
        %v243 = vld [vmem:[%s223 + $0x8] sm:$0xff]
        %s244 = smul.u32 %s21, 16
        %v245 = vlaneseq
        %v246 = vand.u32 %v245, 127
        %v247 = vstv %s244
        %v248 = vadd.s32 %v247, %v246
        %249 = vset.pattern.permute.xlu0 0
        %250 = vperm.xlu0 %249, %v242
        %v251 = vpop.permute.xlu0 %250
        %252 = vset.pattern.permute.xlu0 0
        %253 = vperm.xlu0 %252, %v243
        %v254 = vpop.permute.xlu0 %253
        %vm255 = vcmp.eq.s32.totalorder %v248, %v251
        %vm256 = vcmp.eq.s32.totalorder %v248, %v254
        %v257 = vsel %vm255, 1, 0
        %v258 = vsel %vm256, 1, 0
        %v259 = vcvt.s32.f32 %v257
        %v260 = vcvt.s32.f32 %v258
        %v261 = vmul.f32 %v259, 0.9
        %v262 = vmul.f32 %v260, 0.9
        %v263 = vadd.f32 %v261, 0.00625
        %v264 = vadd.f32 %v262, 0.00625
        %v265 = vld [vmem:[#allocation4] sm:$0xff]
        %v266 = vld [vmem:[#allocation4 + $0x8] sm:$0xff]
        %v267 = vmul.f32 %v263, %v240
        %v268 = vmul.f32 %v264, %v241
        %vm269 = vcmask 130048
        %v270 = vsel %vm269, %v267, 0.0
        %271 = vadd.xlane.f32.xlu0 %v270
        %v272 = vpop.xlane.xlu0 %271
        %v273 = vsel %vm269, %v268, 0.0
        %274 = vadd.xlane.f32.xlu0 %v273
        %v275 = vpop.xlane.xlu0 %274
        %v276 = vadd.f32 %v265, %v272
        %v277 = vadd.f32 %v266, %v275
        %vm278 = vcmask 7168
        %279 = vst.msk [vmem:[#allocation4] sm:$0xff] %vm278, %v276
        %280 = vst.msk [vmem:[#allocation4 + $0x8] sm:$0xff] %vm278, %v277
        %v281 = vld [vmem:[#allocation2] sm:$0xff]
        %v282 = vld [vmem:[#allocation2 + $0x8] sm:$0xff]
        %v283 = vsel %vm269, %v240, -inf
        %284 = vmax.xlane.f32.xlu0 %v283
        %v285 = vpop.xlane.xlu0 %284
        %v286 = vsel %vm269, %v241, -inf
        %287 = vmax.xlane.f32.xlu0 %v286
        %v288 = vpop.xlane.xlu0 %287
        %v289 = vmax.f32 %v281, %v285
        %v290 = vmax.f32 %v282, %v288
        %v291 = vld [vmem:[#allocation3] sm:$0xff]
        %v292 = vld [vmem:[#allocation3 + $0x8] sm:$0xff]
        %v293 = vsub.f32 %v281, %v289
        %v294 = vsub.f32 %v282, %v290
        %v295 = vmul.f32 %v293, 1.442695
        %v296 = vpow.pop %v295
        %v297 = vmul.f32 %v294, 1.442695
        %v298 = vpow.pop %v297
        %v299 = vmul.f32 %v291, %v296
        %v300 = vmul.f32 %v292, %v298
        %302 = vset.pattern.permute.xlu0 0
        %303 = vperm.xlu0 %302, %v289
        %v304 = vpop.permute.xlu0 %303
        %307 = vset.pattern.permute.xlu0 0
        %308 = vperm.xlu0 %307, %v290
        %v309 = vpop.permute.xlu0 %308
        %v311 = vsub.f32 %v240, %v304
        %v312 = vsub.f32 %v241, %v309
        %v313 = vmul.f32 %v311, 1.442695
        %v314 = vpow.pop %v313
        %v315 = vmul.f32 %v312, 1.442695
        %v316 = vpow.pop %v315
        %v317 = vsel %vm269, %v314, 0.0
        %318 = vadd.xlane.f32.xlu0 %v317
        %v319 = vpop.xlane.xlu0 %318
        %v320 = vsel %vm269, %v316, 0.0
        %321 = vadd.xlane.f32.xlu0 %v320
        %v322 = vpop.xlane.xlu0 %321
        %v323 = vadd.f32 %v299, %v319
        %v324 = vadd.f32 %v300, %v322
        %325 = vst.msk [vmem:[#allocation3] sm:$0xff] %vm278, %v323
        %326 = vst.msk [vmem:[#allocation3 + $0x8] sm:$0xff] %vm278, %v324
        %327 = vst.msk [vmem:[#allocation2] sm:$0xff] %vm278, %v289
        %328 = vst.msk [vmem:[#allocation2 + $0x8] sm:$0xff] %vm278, %v290
        // Predicated region
        $region33: #{tpu_custom_call.1} parent=27 // pred_check
          %p329 = pneg %p229
        $region34: #{tpu_custom_call.1} parent=27 // pred_check_branch
          %331 = sbr.rel (%p329) target = $region36
        $region35: #{tpu_custom_call.1} parent=27 // pred_region
          %v332 = vld [vmem:[#allocation2] sm:$0xff]
          %v333 = vld [vmem:[#allocation2 + $0x8] sm:$0xff]
          %v334 = vld [vmem:[#allocation3] sm:$0xff]
          %v335 = vld [vmem:[#allocation3 + $0x8] sm:$0xff]
          %v336 = vlog2.pop %v334
          %v337 = vmul.f32 %v336, 0.6931472
          %v338 = vlog2.pop %v335
          %v339 = vmul.f32 %v338, 0.6931472
          %v340 = vadd.f32 %v332, %v337
          %v341 = vadd.f32 %v333, %v339
          %v342 = vld [vmem:[#allocation4] sm:$0xff]
          %v343 = vld [vmem:[#allocation4 + $0x8] sm:$0xff]
          %v344 = vsub.f32 %v340, %v342
          %v345 = vsub.f32 %v341, %v343
          %s346 = smul.u32 %s20, 16
          %v347 = vlaneseq
          %v348 = vshrl.u32 %v347, 7
          %v349 = vadd.s32 %v348, 8
          %v350 = vstv %s346
          %v351 = vadd.s32 %v350, %v348
          %v352 = vadd.s32 %v350, %v349
          %vm353 = vcmp.lt.s32.totalorder %v351, 20
          %vm354 = vcmp.lt.s32.totalorder %v352, 20
          %v355 = vsel %vm353, %v344, 0.0
          %v356 = vsel %vm354, %v345, 0.0
          %v357 = vsel %vm278, %v355, 0.0
          %v358 = vsel %vm278, %v356, 0.0
          %v359 = vadd.f32 %v357, %v358
          %360 = vadd.xlane.f32.xlu0 %v359
          %v361 = vpop.xlane.xlu0 %360
          %v362 = vrot.slane %v361, 4
          %v363 = vadd.f32 %v361, %v362
          %v364 = vrot.slane %v363, 2
          %v365 = vadd.f32 %v363, %v364
          %v366 = vrot.slane %v365, 1
          %v367 = vadd.f32 %v365, %v366
          %s368 = vtos %v367
          %v369 = vstv %s368
          %370 = vst [vmem:[%s197] sm:$0xff] %v369
        $region36: #{tpu_custom_call.1} parent=27 // pred_fallthru
          _
        %s371 = sand.u32 %s90, 1
        %s372 = scalar_lea.sflag [#allocation6], %s371
        %s373 = sand.u32 %s90, 1
        %s374 = smul.addr %s373, 8
        %s375 = scalar_lea.vmem [#allocation5], %s374
        // Predicated region
        $region37: #{tpu_custom_call.1} parent=27 // pred_check
          %p376 = pneg %p100
        $region38: #{tpu_custom_call.1} parent=27 // pred_check_branch
          %378 = sbr.rel (%p376) target = $region40
        $region39: #{tpu_custom_call.1} parent=27 // pred_region
          %380 = vsyncadd %s372, 0
          %s381 = smul.addr %s20, 8
          %s382 = scalar_lea.hbm %s2, %s381
          %s384 = sshll.u32 %s375, 4
          %s385 = int_to_ptr.vmem [resolvable:$true] %s384
          %s386 = sshll.u32 %s382, 4
          %s387 = int_to_ptr.hbm [resolvable:$true] %s386
          %389 = dma.vmem_to_hbm [thread:$0]  %s385, 128, %s387, %s372
        $region40: #{tpu_custom_call.1} parent=27 // pred_fallthru
          _
      $region28: #{tpu_custom_call.1} parent=5 // pred_fallthru
        _
      %p390 = scmp.le.s32.totalorder 2, %s11
      // Predicated region
      $region41: #{tpu_custom_call.1} parent=5 // pred_check
        %p391 = pneg %p390
      $region42: #{tpu_custom_call.1} parent=5 // pred_check_branch
        %393 = sbr.rel (%p391) target = $region44
      $region43: #{tpu_custom_call.1} parent=5 // pred_region
        %s394 = ssub.s32 %s11, 2
        // Predicated region
        $region45: #{tpu_custom_call.1} parent=43 // pred_check
          %p395 = pneg %p106
        $region46: #{tpu_custom_call.1} parent=43 // pred_check_branch
          %397 = sbr.rel (%p395) target = $region48
        $region47: #{tpu_custom_call.1} parent=43 // pred_region
          %s398 = sand.u32 %s91, 1
          %s399 = scalar_lea.sflag [#allocation6], %s398
          %s400 = sand.u32 %s91, 1
          %s401 = smul.addr %s400, 8
          %s402 = scalar_lea.vmem [#allocation5], %s401
          %404 = dma.done %s399, 128
        $region48: #{tpu_custom_call.1} parent=43 // pred_fallthru
          _
      $region44: #{tpu_custom_call.1} parent=5 // pred_fallthru
        _
    $region6: #{tpu_custom_call.1} parent=1 // loop_footer
      %s15 = sadd.s32 1, %s11
    $region7: #{tpu_custom_call.1} parent=1 // loop_footer_branch
      %10 = sbr.rel target = $region3
    $region8: #{tpu_custom_call.1} parent=1 // loop_exit
      _
    %405 = vsyncpa [#allocation6], 1
    %s406 = scalar_lea.sflag [#allocation6], 1
    %407 = vsyncpa %s406, 1

</llo_original>
